<compile_context>
chip_gen: v7x
topology: tpu7x:2x2x1
jax: 0.10.0
libtpu: 0.0.40
codegen_flags: <defaults>
</compile_context>

<pallas_src>
import functools
import math

import jax
import jax.numpy as jnp
from jax.experimental import pallas as pl
from jax.experimental.pallas import tpu as pltpu

D_IN, HIDDEN, D_OUT = 768, 256, 128


def _mlp_kernel(x_ref, w1_ref, b1_ref, w2_ref, b2_ref, o_ref):
    # Cast the streamed x tile to the MXU dtype on the VPU (hidden under DMA).
    x = x_ref[...].astype(w1_ref.dtype)
    # First linear on the MXU (bf16 operands, f32 accumulation).
    h = jnp.dot(x, w1_ref[...], preferred_element_type=jnp.float32)
    # Bias + ReLU in f32 on the VPU.
    h = jnp.maximum(h + b1_ref[...], 0.0)
    # Second linear: cast the f32 activation back to the weight dtype for the
    # MXU (one extra bf16 rounding step, acceptable for this MLP).
    y = jnp.dot(h.astype(w2_ref.dtype), w2_ref[...],
                preferred_element_type=jnp.float32)
    y = y + b2_ref[...]
    o_ref[...] = y.astype(o_ref.dtype)


def _round_up(n, m):
    return ((n + m - 1) // m) * m


def _choose_tb(B, block_b):
    """Pick the batch tile (rows per grid step)."""
    if B < 8:
        # A block dim equal to the full array dim is always legal.
        return B
    if B <= 256:
        # One tile covering the whole (small) batch.
        return _round_up(B, 8)
    # Large batches: big tiles to amortize the ~0.35 us per-grid-step overhead,
    # rounded to a multiple of 256 (v6e/v7x MXU width), but capped so the grid
    # keeps >=2 steps -> the "parallel" batch axis shards across v7x's 2 TCs.
    half = _round_up(-(-B // 2), 256)
    return max(256, min(_round_up(block_b, 256), half))


@functools.partial(jax.jit, static_argnames=("block_b", "compute_dtype"))
def language_model_forward(x, w1, b1, w2, b2, *, block_b=1024,
                           compute_dtype=jnp.bfloat16):
    """x: (B, D_in); w1: (D_in, H); b1: (1, H); w2: (H, D_out); b2: (1, D_out)."""
    B, d_in = x.shape
    H = w1.shape[1]
    d_out = w2.shape[1]
    out_dtype = x.dtype

    # Weights in the MXU dtype; biases stay f32 (f32 bias add / ReLU).
    w1_c = w1.astype(compute_dtype)
    w2_c = w2.astype(compute_dtype)
    b1_c = b1.astype(jnp.float32)
    b2_c = b2.astype(jnp.float32)

    tb = _choose_tb(B, block_b)
    grid = (pl.cdiv(B, tb),)

    # VMEM footprint: double-buffered x/out tiles, resident (double-buffered)
    # bf16 weights, f32 biases and the f32 intermediates. 2x headroom, capped
    # at 36 MiB (well under v7x's 64 MiB physical VMEM).
    x_bytes = jnp.dtype(x.dtype).itemsize
    c_bytes = jnp.dtype(compute_dtype).itemsize
    o_bytes = jnp.dtype(out_dtype).itemsize
    vmem_needed = (
        2 * tb * d_in * x_bytes                     # x tiles (native dtype)
        + 2 * tb * d_out * o_bytes                  # out tiles
        + 2 * (d_in * H + H * d_out) * c_bytes      # W1 / W2 (2 buffers each)
        + 2 * (H + d_out) * 4 * 2                   # biases
        + tb * H * 4 + tb * d_out * 4               # f32 h / y intermediates
    )
    vmem_limit = int(min(36 * 1024 * 1024,
                         max(16 * 1024 * 1024, 2 * vmem_needed)))

    return pl.pallas_call(
        _mlp_kernel,
        out_shape=jax.ShapeDtypeStruct((B, d_out), out_dtype),
        grid_spec=pltpu.PrefetchScalarGridSpec(
            num_scalar_prefetch=0,
            grid=grid,
            in_specs=[
                pl.BlockSpec((tb, d_in), lambda i: (i, 0)),   # x tile (streamed)
                pl.BlockSpec((d_in, H), lambda i: (0, 0)),    # W1 (resident)
                pl.BlockSpec((1, H), lambda i: (0, 0)),       # b1 (resident)
                pl.BlockSpec((H, d_out), lambda i: (0, 0)),   # W2 (resident)
                pl.BlockSpec((1, d_out), lambda i: (0, 0)),   # b2 (resident)
            ],
            out_specs=pl.BlockSpec((tb, d_out), lambda i: (i, 0)),
        ),
        compiler_params=pltpu.CompilerParams(
            # Batch tiles are independent -> shard across v7x's 2 TensorCores.
            dimension_semantics=("parallel",),
            vmem_limit_bytes=vmem_limit,
        ),
    )(x, w1_c, b1_c, w2_c, b2_c)


def init_params(key, input_size=D_IN, hidden=HIDDEN, output_features=D_OUT,
                dtype=jnp.float32):
    """Deterministic init mimicking PyTorch nn.Linear defaults (uniform +-1/sqrt(fan_in))."""
    k1, k2, k3, k4 = jax.random.split(key, 4)
    bound1 = 1.0 / math.sqrt(input_size)
    bound2 = 1.0 / math.sqrt(hidden)
    # Stored as (in, out) -- transposed relative to PyTorch's (out, in).
    w1 = jax.random.uniform(k1, (input_size, hidden), dtype, -bound1, bound1)
    b1 = jax.random.uniform(k2, (1, hidden), dtype, -bound1, bound1)
    w2 = jax.random.uniform(k3, (hidden, output_features), dtype, -bound2, bound2)
    b2 = jax.random.uniform(k4, (1, output_features), dtype, -bound2, bound2)
    return w1, b1, w2, b2


def reference_forward(x, w1, b1, w2, b2):
    """Pure f32 reference (PyTorch semantics)."""
    h = jnp.maximum(x @ w1 + b1, 0.0)
    return h @ w2 + b2


def reference_forward_matched(x, w1, b1, w2, b2, compute_dtype=jnp.bfloat16):
    """Reference with the same bf16-operand / f32-accumulate recipe as the kernel."""
    xb = x.astype(compute_dtype)
    w1b = w1.astype(compute_dtype)
    w2b = w2.astype(compute_dtype)
    h = jnp.dot(xb, w1b, preferred_element_type=jnp.float32) + b1.astype(jnp.float32)
    h = jnp.maximum(h, 0.0)
    y = jnp.dot(h.astype(compute_dtype), w2b,
                preferred_element_type=jnp.float32) + b2.astype(jnp.float32)
    return y.astype(x.dtype)


if __name__ == "__main__":
    key = jax.random.PRNGKey(0)
    kx, kp, kx2 = jax.random.split(key, 3)

    w1, b1, w2, b2 = init_params(kp)

    # Small smoke test (B=8 -> a single 8-row tile).
    x_small = jax.random.normal(kx, (8, D_IN), jnp.float32)
    out_small = jax.block_until_ready(
        language_model_forward(x_small, w1, b1, w2, b2))
    assert out_small.shape == (8, D_OUT)

    # Larger, non-divisible batch: exercises 256-row tiles, a 2-step
    # "parallel" grid (both v7x TensorCores) and masked partial-block output.
    B = 384
    x_big = jax.random.normal(kx2, (B, D_IN), jnp.float32)
    out_big = jax.block_until_ready(
        language_model_forward(x_big, w1, b1, w2, b2))
    assert out_big.shape == (B, D_OUT)

    for x, out in ((x_small, out_small), (x_big, out_big)):
        ref_m = reference_forward_matched(x, w1, b1, w2, b2)
        ref_f32 = reference_forward(x, w1, b1, w2, b2)
        assert jnp.allclose(out, ref_m, atol=2e-3, rtol=2e-3), \
            "mismatch vs bf16-matched reference"
        assert jnp.allclose(out, ref_f32, atol=5e-2, rtol=5e-2), \
            "mismatch vs f32 reference"

    print("KERNEL_OK")
</pallas_src>

<mosaic_0001>
module attributes {stable_mosaic.version = 11 : i64} {
  func.func @_mlp_kernel(%arg0: i32, %arg1: memref<8x768xf32, #tpu.memory_space<vmem>>, %arg2: memref<768x256xbf16, #tpu.memory_space<vmem>>, %arg3: memref<1x256xf32, #tpu.memory_space<vmem>>, %arg4: memref<256x128xbf16, #tpu.memory_space<vmem>>, %arg5: memref<1x128xf32, #tpu.memory_space<vmem>>, %arg6: memref<8x128xf32, #tpu.memory_space<vmem>>) attributes {dimension_semantics = [#tpu.dimension_semantics<parallel>], iteration_bounds = array<i64: 1>, scalar_prefetch = 0 : i64, scratch_operands = 0 : i64, tpu.core_type = #tpu.core_type<tc>, window_params = [{transform_indices = @transform_0, window_bounds = array<i64: 8, 768>}, {pipeline_mode = #tpu.pipeline_mode<synchronous>, transform_indices = @transform_1, window_bounds = array<i64: 768, 256>}, {pipeline_mode = #tpu.pipeline_mode<synchronous>, transform_indices = @transform_2, window_bounds = array<i64: 1, 256>}, {pipeline_mode = #tpu.pipeline_mode<synchronous>, transform_indices = @transform_3, window_bounds = array<i64: 256, 128>}, {pipeline_mode = #tpu.pipeline_mode<synchronous>, transform_indices = @transform_4, window_bounds = array<i64: 1, 128>}, {transform_indices = @transform_5, window_bounds = array<i64: 8, 128>}]} {
    %c0 = arith.constant 0 : index
    %c0_0 = arith.constant 0 : index
    %0 = vector.load %arg1[%c0, %c0_0] : memref<8x768xf32, #tpu.memory_space<vmem>>, vector<8x768xf32>
    %1 = arith.truncf %0 : vector<8x768xf32> to vector<8x768xbf16>
    %c0_1 = arith.constant 0 : index
    %c0_2 = arith.constant 0 : index
    %2 = vector.load %arg2[%c0_1, %c0_2] : memref<768x256xbf16, #tpu.memory_space<vmem>>, vector<768x256xbf16>
    %cst = arith.constant dense<0.000000e+00> : vector<8x256xf32>
    %3 = tpu.matmul %1, %2, %cst {dimension_numbers = #tpu.dot_dimension_numbers<[1], [0], [0], [1], [0, 0, 1, 1], [], []>} : vector<8x768xbf16>, vector<768x256xbf16>, vector<8x256xf32> -> vector<8x256xf32>
    %c0_3 = arith.constant 0 : index
    %c0_4 = arith.constant 0 : index
    %4 = vector.load %arg3[%c0_3, %c0_4] : memref<1x256xf32, #tpu.memory_space<vmem>>, vector<1x256xf32>
    %5 = vector.broadcast %4 : vector<1x256xf32> to vector<8x256xf32>
    %6 = arith.addf %3, %5 : vector<8x256xf32>
    %cst_5 = arith.constant 0.000000e+00 : f32
    %7 = vector.broadcast %cst_5 : f32 to vector<8x256xf32>
    %8 = arith.maximumf %6, %7 : vector<8x256xf32>
    %9 = arith.truncf %8 : vector<8x256xf32> to vector<8x256xbf16>
    %c0_6 = arith.constant 0 : index
    %c0_7 = arith.constant 0 : index
    %10 = vector.load %arg4[%c0_6, %c0_7] : memref<256x128xbf16, #tpu.memory_space<vmem>>, vector<256x128xbf16>
    %cst_8 = arith.constant dense<0.000000e+00> : vector<8x128xf32>
    %11 = tpu.matmul %9, %10, %cst_8 {dimension_numbers = #tpu.dot_dimension_numbers<[1], [0], [0], [1], [0, 0, 1, 1], [], []>} : vector<8x256xbf16>, vector<256x128xbf16>, vector<8x128xf32> -> vector<8x128xf32>
    %c0_9 = arith.constant 0 : index
    %c0_10 = arith.constant 0 : index
    %12 = vector.load %arg5[%c0_9, %c0_10] : memref<1x128xf32, #tpu.memory_space<vmem>>, vector<1x128xf32>
    %13 = vector.broadcast %12 : vector<1x128xf32> to vector<8x128xf32>
    %14 = arith.addf %11, %13 : vector<8x128xf32>
    %c0_11 = arith.constant 0 : index
    %c0_12 = arith.constant 0 : index
    %15 = vector.load %arg6[%c0_11, %c0_12] : memref<8x128xf32, #tpu.memory_space<vmem>>, vector<8x128xf32>
    tpu.vector_store %arg6[%c0_11, %c0_12], %14 {strides = array<i32>} : memref<8x128xf32, #tpu.memory_space<vmem>>, vector<8x128xf32>,
    return
  }
  func.func @transform_0(%arg0: i32) -> (i32, i32) {
    %c0_i32 = arith.constant 0 : i32
    %c0_i32_0 = arith.constant 0 : i32
    return %arg0, %c0_i32 : i32, i32
  }
  func.func @transform_1(%arg0: i32) -> (i32, i32) {
    %c0_i32 = arith.constant 0 : i32
    %c0_i32_0 = arith.constant 0 : i32
    %c0_i32_1 = arith.constant 0 : i32
    return %c0_i32, %c0_i32_0 : i32, i32
  }
  func.func @transform_2(%arg0: i32) -> (i32, i32) {
    %c0_i32 = arith.constant 0 : i32
    %c0_i32_0 = arith.constant 0 : i32
    %c0_i32_1 = arith.constant 0 : i32
    return %c0_i32, %c0_i32_0 : i32, i32
  }
  func.func @transform_3(%arg0: i32) -> (i32, i32) {
    %c0_i32 = arith.constant 0 : i32
    %c0_i32_0 = arith.constant 0 : i32
    %c0_i32_1 = arith.constant 0 : i32
    return %c0_i32, %c0_i32_0 : i32, i32
  }
  func.func @transform_4(%arg0: i32) -> (i32, i32) {
    %c0_i32 = arith.constant 0 : i32
    %c0_i32_0 = arith.constant 0 : i32
    %c0_i32_1 = arith.constant 0 : i32
    return %c0_i32, %c0_i32_0 : i32, i32
  }
  func.func @transform_5(%arg0: i32) -> (i32, i32) {
    %c0_i32 = arith.constant 0 : i32
    %c0_i32_0 = arith.constant 0 : i32
    return %arg0, %c0_i32 : i32, i32
  }
}

</mosaic_0001>

<llo_original>
// kernel: language_model_forward.1
$region0: #{language_model_forward.1}
  #allocation0 [shape = 'u32[]', space=smem, size = 0x4, offset = 0x4, fixed_abs, tag = 'smem constant byte address 0x4 - core index']
  #allocation1 [shape = 'u32[144,128]{1,0:T(1,128)}', space=vmem, size = 0x12000, scoped, tag = 'internal scratch']
  %s0 = inlined_call_operand.vmem [shape: f32[8,768], index: 0, kind: input, shape index: {}]
  %s1 = inlined_call_operand.vmem [shape: bf16[768,256], index: 1, kind: input, shape index: {}]
  %s2 = inlined_call_operand.vmem [shape: f32[1,256], index: 2, kind: input, shape index: {}]
  %s3 = inlined_call_operand.vmem [shape: bf16[256,128], index: 3, kind: input, shape index: {}]
  %s4 = inlined_call_operand.vmem [shape: f32[1,128], index: 4, kind: input, shape index: {}]
  %s5 = inlined_call_operand.hbm [shape: f32[8,128], index: 5, kind: output, shape index: {}]
  %s6 = sld [smem:[#allocation0]]
  $region30: #{language_model_forward.1} parent=0
    _
  %s8 = ssub.s32 1, %s6
  %s9 = scalar_select 0, %s8, %s6
  $region1: #{language_model_forward.1} parent=0
    #allocation2 [shape = 'u8[4096]{0}', space=vmem, size = 0x1000, scoped, tag = 'output window, operand 0, single buffered']
    #allocation3 [shape = 's32[1]{0}', space=sflag, size = 0x4, scoped, tag = 'scoped memory for language_model_forward.1']
    %10 = vsyncpa [#allocation3], 0
    // Predicated region
    $region2: #{language_model_forward.1} parent=1 // pred_check
      _
    $region3: #{language_model_forward.1} parent=1 // pred_check_branch
      %12 = sbr.rel (0) target = $region5
    $region4: #{language_model_forward.1} parent=1 // pred_region
      _
    $region5: #{language_model_forward.1} parent=1 // pred_fallthru
      _
    // Predicated region
    $region6: #{language_model_forward.1} parent=1 // pred_check
      _
    $region7: #{language_model_forward.1} parent=1 // pred_check_branch
      %14 = sbr.rel (0) target = $region9
    $region8: #{language_model_forward.1} parent=1 // pred_region
      _
    $region9: #{language_model_forward.1} parent=1 // pred_fallthru
      _
    // Predicated region
    $region10: #{language_model_forward.1} parent=1 // pred_check
      _
    $region11: #{language_model_forward.1} parent=1 // pred_check_branch
      %16 = sbr.rel (0) target = $region13
    $region12: #{language_model_forward.1} parent=1 // pred_region
      _
    $region13: #{language_model_forward.1} parent=1 // pred_fallthru
      _
    // Predicated region
    $region14: #{language_model_forward.1} parent=1 // pred_check
      _
    $region15: #{language_model_forward.1} parent=1 // pred_check_branch
      %18 = sbr.rel (0) target = $region17
    $region16: #{language_model_forward.1} parent=1 // pred_region
      _
    $region17: #{language_model_forward.1} parent=1 // pred_fallthru
      _
    // Predicated region
    $region18: #{language_model_forward.1} parent=1 // pred_check
      _
    $region19: #{language_model_forward.1} parent=1 // pred_check_branch
      %20 = sbr.rel (0) target = $region21
    $region20: #{language_model_forward.1} parent=1 // pred_region
      _
    $region21: #{language_model_forward.1} parent=1 // pred_fallthru
      _
    %v22 = vld [vmem:[%s0] sm:$0xff]
    %v23 = vld [vmem:[%s0 + $0x8] sm:$0xff]
    %v24 = vld [vmem:[%s0 + $0x10] sm:$0xff]
    %v25 = vld [vmem:[%s0 + $0x18] sm:$0xff]
    %v26 = vld [vmem:[%s0 + $0x20] sm:$0xff]
    %v27 = vld [vmem:[%s0 + $0x28] sm:$0xff]
    %v28 = vpack.c.bf16 %v22, %v22
    %v29 = vpack.c.bf16 %v23, %v23
    %v30 = vpack.c.bf16 %v24, %v24
    %v31 = vpack.c.bf16 %v25, %v25
    %v32 = vpack.c.bf16 %v26, %v26
    %v33 = vpack.c.bf16 %v27, %v27
    %v34 = vld [vmem:[%s1] sm:$0xff]
    %v35 = vld [vmem:[%s1 + $0x8] sm:$0xff]
    %v36 = vld [vmem:[%s1 + $0x10] sm:$0xff]
    %v37 = vld [vmem:[%s1 + $0x18] sm:$0xff]
    %v38 = vld [vmem:[%s1 + $0x20] sm:$0xff]
    %v39 = vld [vmem:[%s1 + $0x28] sm:$0xff]
    %v40 = vld [vmem:[%s1 + $0x30] sm:$0xff]
    %v41 = vld [vmem:[%s1 + $0x38] sm:$0xff]
    %v42 = vld [vmem:[%s1 + $0x40] sm:$0xff]
    %v43 = vld [vmem:[%s1 + $0x48] sm:$0xff]
    %v44 = vld [vmem:[%s1 + $0x50] sm:$0xff]
    %v45 = vld [vmem:[%s1 + $0x58] sm:$0xff]
    %v46 = vld [vmem:[%s1 + $0x60] sm:$0xff]
    %v47 = vld [vmem:[%s1 + $0x68] sm:$0xff]
    %v48 = vld [vmem:[%s1 + $0x70] sm:$0xff]
    %v49 = vld [vmem:[%s1 + $0x78] sm:$0xff]
    %v50 = vld [vmem:[%s1 + $0x80] sm:$0xff]
    %v51 = vld [vmem:[%s1 + $0x88] sm:$0xff]
    %v52 = vld [vmem:[%s1 + $0x90] sm:$0xff]
    %v53 = vld [vmem:[%s1 + $0x98] sm:$0xff]
    %v54 = vld [vmem:[%s1 + $0xa0] sm:$0xff]
    %v55 = vld [vmem:[%s1 + $0xa8] sm:$0xff]
    %v56 = vld [vmem:[%s1 + $0xb0] sm:$0xff]
    %v57 = vld [vmem:[%s1 + $0xb8] sm:$0xff]
    %v58 = vld [vmem:[%s1 + $0xc0] sm:$0xff]
    %v59 = vld [vmem:[%s1 + $0xc8] sm:$0xff]
    %v60 = vld [vmem:[%s1 + $0xd0] sm:$0xff]
    %v61 = vld [vmem:[%s1 + $0xd8] sm:$0xff]
    %v62 = vld [vmem:[%s1 + $0xe0] sm:$0xff]
    %v63 = vld [vmem:[%s1 + $0xe8] sm:$0xff]
    %v64 = vld [vmem:[%s1 + $0xf0] sm:$0xff]
    %v65 = vld [vmem:[%s1 + $0xf8] sm:$0xff]
    %v66 = vld [vmem:[%s1 + $0x100] sm:$0xff]
    %v67 = vld [vmem:[%s1 + $0x108] sm:$0xff]
    %v68 = vld [vmem:[%s1 + $0x110] sm:$0xff]
    %v69 = vld [vmem:[%s1 + $0x118] sm:$0xff]
    %v70 = vld [vmem:[%s1 + $0x120] sm:$0xff]
    %v71 = vld [vmem:[%s1 + $0x128] sm:$0xff]
    %v72 = vld [vmem:[%s1 + $0x130] sm:$0xff]
    %v73 = vld [vmem:[%s1 + $0x138] sm:$0xff]
    %v74 = vld [vmem:[%s1 + $0x140] sm:$0xff]
    %v75 = vld [vmem:[%s1 + $0x148] sm:$0xff]
    %v76 = vld [vmem:[%s1 + $0x150] sm:$0xff]
    %v77 = vld [vmem:[%s1 + $0x158] sm:$0xff]
    %v78 = vld [vmem:[%s1 + $0x160] sm:$0xff]
    %v79 = vld [vmem:[%s1 + $0x168] sm:$0xff]
    %v80 = vld [vmem:[%s1 + $0x170] sm:$0xff]
    %v81 = vld [vmem:[%s1 + $0x178] sm:$0xff]
    %v82 = vld [vmem:[%s1 + $0x180] sm:$0xff]
    %v83 = vld [vmem:[%s1 + $0x188] sm:$0xff]
    %v84 = vld [vmem:[%s1 + $0x190] sm:$0xff]
    %v85 = vld [vmem:[%s1 + $0x198] sm:$0xff]
    %v86 = vld [vmem:[%s1 + $0x1a0] sm:$0xff]
    %v87 = vld [vmem:[%s1 + $0x1a8] sm:$0xff]
    %v88 = vld [vmem:[%s1 + $0x1b0] sm:$0xff]
    %v89 = vld [vmem:[%s1 + $0x1b8] sm:$0xff]
    %v90 = vld [vmem:[%s1 + $0x1c0] sm:$0xff]
    %v91 = vld [vmem:[%s1 + $0x1c8] sm:$0xff]
    %v92 = vld [vmem:[%s1 + $0x1d0] sm:$0xff]
    %v93 = vld [vmem:[%s1 + $0x1d8] sm:$0xff]
    %v94 = vld [vmem:[%s1 + $0x1e0] sm:$0xff]
    %v95 = vld [vmem:[%s1 + $0x1e8] sm:$0xff]
    %v96 = vld [vmem:[%s1 + $0x1f0] sm:$0xff]
    %v97 = vld [vmem:[%s1 + $0x1f8] sm:$0xff]
    %v98 = vld [vmem:[%s1 + $0x200] sm:$0xff]
    %v99 = vld [vmem:[%s1 + $0x208] sm:$0xff]
    %v100 = vld [vmem:[%s1 + $0x210] sm:$0xff]
    %v101 = vld [vmem:[%s1 + $0x218] sm:$0xff]
    %v102 = vld [vmem:[%s1 + $0x220] sm:$0xff]
    %v103 = vld [vmem:[%s1 + $0x228] sm:$0xff]
    %v104 = vld [vmem:[%s1 + $0x230] sm:$0xff]
    %v105 = vld [vmem:[%s1 + $0x238] sm:$0xff]
    %v106 = vld [vmem:[%s1 + $0x240] sm:$0xff]
    %v107 = vld [vmem:[%s1 + $0x248] sm:$0xff]
    %v108 = vld [vmem:[%s1 + $0x250] sm:$0xff]
    %v109 = vld [vmem:[%s1 + $0x258] sm:$0xff]
    %v110 = vld [vmem:[%s1 + $0x260] sm:$0xff]
    %v111 = vld [vmem:[%s1 + $0x268] sm:$0xff]
    %v112 = vld [vmem:[%s1 + $0x270] sm:$0xff]
    %v113 = vld [vmem:[%s1 + $0x278] sm:$0xff]
    %v114 = vld [vmem:[%s1 + $0x280] sm:$0xff]
    %v115 = vld [vmem:[%s1 + $0x288] sm:$0xff]
    %v116 = vld [vmem:[%s1 + $0x290] sm:$0xff]
    %v117 = vld [vmem:[%s1 + $0x298] sm:$0xff]
    %v118 = vld [vmem:[%s1 + $0x2a0] sm:$0xff]
    %v119 = vld [vmem:[%s1 + $0x2a8] sm:$0xff]
    %v120 = vld [vmem:[%s1 + $0x2b0] sm:$0xff]
    %v121 = vld [vmem:[%s1 + $0x2b8] sm:$0xff]
    %v122 = vld [vmem:[%s1 + $0x2c0] sm:$0xff]
    %v123 = vld [vmem:[%s1 + $0x2c8] sm:$0xff]
    %v124 = vld [vmem:[%s1 + $0x2d0] sm:$0xff]
    %v125 = vld [vmem:[%s1 + $0x2d8] sm:$0xff]
    %v126 = vld [vmem:[%s1 + $0x2e0] sm:$0xff]
    %v127 = vld [vmem:[%s1 + $0x2e8] sm:$0xff]
    %v128 = vld [vmem:[%s1 + $0x2f0] sm:$0xff]
    %v129 = vld [vmem:[%s1 + $0x2f8] sm:$0xff]
    %v130 = vld [vmem:[%s2] sm:$0x3]
    %v132 = vlaneseq
    %v133 = vshrl.u32 %v132, 7
    %v134 = vsub.s32 0, %v133
    %v135 = vrot.slane %v130, %v134
    %v136 = vlaneseq
    %v137 = vshrl.u32 %v136, 7
    %v138 = vsub.s32 1, %v137
    %v139 = vrot.slane %v130, %v138
    %v238 = vunpack.c.l.b16 %v34
    %v239 = vunpack.c.h.b16 %v34
    %v240 = vunpack.c.l.b16 %v35
    %v241 = vunpack.c.h.b16 %v35
    %v242 = vunpack.c.l.b16 %v36
    %v243 = vunpack.c.h.b16 %v36
    %v244 = vunpack.c.l.b16 %v37
    %v245 = vunpack.c.h.b16 %v37
    %v246 = vunpack.c.l.b16 %v38
    %v247 = vunpack.c.h.b16 %v38
    %v248 = vunpack.c.l.b16 %v39
    %v249 = vunpack.c.h.b16 %v39
    %v250 = vunpack.c.l.b16 %v40
    %v251 = vunpack.c.h.b16 %v40
    %v252 = vunpack.c.l.b16 %v41
    %v253 = vunpack.c.h.b16 %v41
    %v254 = vunpack.c.l.b16 %v42
    %v255 = vunpack.c.h.b16 %v42
    %v256 = vunpack.c.l.b16 %v43
    %v257 = vunpack.c.h.b16 %v43
    %v258 = vunpack.c.l.b16 %v44
    %v259 = vunpack.c.h.b16 %v44
    %v260 = vunpack.c.l.b16 %v45
    %v261 = vunpack.c.h.b16 %v45
    %v262 = vunpack.c.l.b16 %v46
    %v263 = vunpack.c.h.b16 %v46
    %v264 = vunpack.c.l.b16 %v47
    %v265 = vunpack.c.h.b16 %v47
    %v266 = vunpack.c.l.b16 %v48
    %v267 = vunpack.c.h.b16 %v48
    %v268 = vunpack.c.l.b16 %v49
    %v269 = vunpack.c.h.b16 %v49
    %v270 = vunpack.c.l.b16 %v50
    %v271 = vunpack.c.h.b16 %v50
    %v272 = vunpack.c.l.b16 %v51
    %v273 = vunpack.c.h.b16 %v51
    %v274 = vunpack.c.l.b16 %v52
    %v275 = vunpack.c.h.b16 %v52
    %v276 = vunpack.c.l.b16 %v53
    %v277 = vunpack.c.h.b16 %v53
    %v278 = vunpack.c.l.b16 %v54
    %v279 = vunpack.c.h.b16 %v54
    %v280 = vunpack.c.l.b16 %v55
    %v281 = vunpack.c.h.b16 %v55
    %v282 = vunpack.c.l.b16 %v56
    %v283 = vunpack.c.h.b16 %v56
    %v284 = vunpack.c.l.b16 %v57
    %v285 = vunpack.c.h.b16 %v57
    %v286 = vunpack.c.l.b16 %v58
    %v287 = vunpack.c.h.b16 %v58
    %v288 = vunpack.c.l.b16 %v59
    %v289 = vunpack.c.h.b16 %v59
    %v290 = vunpack.c.l.b16 %v60
    %v291 = vunpack.c.h.b16 %v60
    %v292 = vunpack.c.l.b16 %v61
    %v293 = vunpack.c.h.b16 %v61
    %v294 = vunpack.c.l.b16 %v62
    %v295 = vunpack.c.h.b16 %v62
    %v296 = vunpack.c.l.b16 %v63
    %v297 = vunpack.c.h.b16 %v63
    %v298 = vunpack.c.l.b16 %v64
    %v299 = vunpack.c.h.b16 %v64
    %v300 = vunpack.c.l.b16 %v65
    %v301 = vunpack.c.h.b16 %v65
    %v302 = vunpack.c.l.b16 %v66
    %v303 = vunpack.c.h.b16 %v66
    %v304 = vunpack.c.l.b16 %v67
    %v305 = vunpack.c.h.b16 %v67
    %v306 = vunpack.c.l.b16 %v68
    %v307 = vunpack.c.h.b16 %v68
    %v308 = vunpack.c.l.b16 %v69
    %v309 = vunpack.c.h.b16 %v69
    %v310 = vunpack.c.l.b16 %v70
    %v311 = vunpack.c.h.b16 %v70
    %v312 = vunpack.c.l.b16 %v71
    %v313 = vunpack.c.h.b16 %v71
    %v314 = vunpack.c.l.b16 %v72
    %v315 = vunpack.c.h.b16 %v72
    %v316 = vunpack.c.l.b16 %v73
    %v317 = vunpack.c.h.b16 %v73
    %v318 = vunpack.c.l.b16 %v74
    %v319 = vunpack.c.h.b16 %v74
    %v320 = vunpack.c.l.b16 %v75
    %v321 = vunpack.c.h.b16 %v75
    %v322 = vunpack.c.l.b16 %v76
    %v323 = vunpack.c.h.b16 %v76
    %v324 = vunpack.c.l.b16 %v77
    %v325 = vunpack.c.h.b16 %v77
    %v326 = vunpack.c.l.b16 %v78
    %v327 = vunpack.c.h.b16 %v78
    %v328 = vunpack.c.l.b16 %v79
    %v329 = vunpack.c.h.b16 %v79
    %v330 = vunpack.c.l.b16 %v80
    %v331 = vunpack.c.h.b16 %v80
    %v332 = vunpack.c.l.b16 %v81
    %v333 = vunpack.c.h.b16 %v81
    %v334 = vunpack.c.l.b16 %v82
    %v335 = vunpack.c.h.b16 %v82
    %v336 = vunpack.c.l.b16 %v83
    %v337 = vunpack.c.h.b16 %v83
    %v338 = vunpack.c.l.b16 %v84
    %v339 = vunpack.c.h.b16 %v84
    %v340 = vunpack.c.l.b16 %v85
    %v341 = vunpack.c.h.b16 %v85
    %v342 = vunpack.c.l.b16 %v86
    %v343 = vunpack.c.h.b16 %v86
    %v344 = vunpack.c.l.b16 %v87
    %v345 = vunpack.c.h.b16 %v87
    %v346 = vunpack.c.l.b16 %v88
    %v347 = vunpack.c.h.b16 %v88
    %v348 = vunpack.c.l.b16 %v89
    %v349 = vunpack.c.h.b16 %v89
    %v350 = vunpack.c.l.b16 %v90
    %v351 = vunpack.c.h.b16 %v90
    %v352 = vunpack.c.l.b16 %v91
    %v353 = vunpack.c.h.b16 %v91
    %v354 = vunpack.c.l.b16 %v92
    %v355 = vunpack.c.h.b16 %v92
    %v356 = vunpack.c.l.b16 %v93
    %v357 = vunpack.c.h.b16 %v93
    %v358 = vunpack.c.l.b16 %v94
    %v359 = vunpack.c.h.b16 %v94
    %v360 = vunpack.c.l.b16 %v95
    %v361 = vunpack.c.h.b16 %v95
    %v362 = vunpack.c.l.b16 %v96
    %v363 = vunpack.c.h.b16 %v96
    %v364 = vunpack.c.l.b16 %v97
    %v365 = vunpack.c.h.b16 %v97
    %v366 = vunpack.c.l.b16 %v98
    %v367 = vunpack.c.h.b16 %v98
    %v368 = vunpack.c.l.b16 %v99
    %v369 = vunpack.c.h.b16 %v99
    %v370 = vunpack.c.l.b16 %v100
    %v371 = vunpack.c.h.b16 %v100
    %v372 = vunpack.c.l.b16 %v101
    %v373 = vunpack.c.h.b16 %v101
    %v374 = vunpack.c.l.b16 %v102
    %v375 = vunpack.c.h.b16 %v102
    %v376 = vunpack.c.l.b16 %v103
    %v377 = vunpack.c.h.b16 %v103
    %v378 = vunpack.c.l.b16 %v104
    %v379 = vunpack.c.h.b16 %v104
    %v380 = vunpack.c.l.b16 %v105
    %v381 = vunpack.c.h.b16 %v105
    %v382 = vunpack.c.l.b16 %v106
    %v383 = vunpack.c.h.b16 %v106
    %v384 = vunpack.c.l.b16 %v107
    %v385 = vunpack.c.h.b16 %v107
    %v386 = vunpack.c.l.b16 %v108
    %v387 = vunpack.c.h.b16 %v108
    %v388 = vunpack.c.l.b16 %v109
    %v389 = vunpack.c.h.b16 %v109
    %v390 = vunpack.c.l.b16 %v110
    %v391 = vunpack.c.h.b16 %v110
    %v392 = vunpack.c.l.b16 %v111
    %v393 = vunpack.c.h.b16 %v111
    %v394 = vunpack.c.l.b16 %v112
    %v395 = vunpack.c.h.b16 %v112
    %v396 = vunpack.c.l.b16 %v113
    %v397 = vunpack.c.h.b16 %v113
    %v398 = vunpack.c.l.b16 %v114
    %v399 = vunpack.c.h.b16 %v114
    %v400 = vunpack.c.l.b16 %v115
    %v401 = vunpack.c.h.b16 %v115
    %v402 = vunpack.c.l.b16 %v116
    %v403 = vunpack.c.h.b16 %v116
    %v404 = vunpack.c.l.b16 %v117
    %v405 = vunpack.c.h.b16 %v117
    %v406 = vunpack.c.l.b16 %v118
    %v407 = vunpack.c.h.b16 %v118
    %v408 = vunpack.c.l.b16 %v119
    %v409 = vunpack.c.h.b16 %v119
    %v410 = vunpack.c.l.b16 %v120
    %v411 = vunpack.c.h.b16 %v120
    %v412 = vunpack.c.l.b16 %v121
    %v413 = vunpack.c.h.b16 %v121
    %v414 = vunpack.c.l.b16 %v122
    %v415 = vunpack.c.h.b16 %v122
    %v416 = vunpack.c.l.b16 %v123
    %v417 = vunpack.c.h.b16 %v123
    %v418 = vunpack.c.l.b16 %v124
    %v419 = vunpack.c.h.b16 %v124
    %v420 = vunpack.c.l.b16 %v125
    %v421 = vunpack.c.h.b16 %v125
    %v422 = vunpack.c.l.b16 %v126
    %v423 = vunpack.c.h.b16 %v126
    %v424 = vunpack.c.l.b16 %v127
    %v425 = vunpack.c.h.b16 %v127
    %v426 = vunpack.c.l.b16 %v128
    %v427 = vunpack.c.h.b16 %v128
    %v428 = vunpack.c.l.b16 %v129
    %v429 = vunpack.c.h.b16 %v129
    %v430 = vpack.c.b16 %v240, %v238
    %v431 = vpack.c.b16 %v241, %v239
    %v432 = vpack.c.b16 %v244, %v242
    %v433 = vpack.c.b16 %v245, %v243
    %v434 = vpack.c.b16 %v248, %v246
    %v435 = vpack.c.b16 %v249, %v247
    %v436 = vpack.c.b16 %v252, %v250
    %v437 = vpack.c.b16 %v253, %v251
    %v438 = vpack.c.b16 %v256, %v254
    %v439 = vpack.c.b16 %v257, %v255
    %v440 = vpack.c.b16 %v260, %v258
    %v441 = vpack.c.b16 %v261, %v259
    %v442 = vpack.c.b16 %v264, %v262
    %v443 = vpack.c.b16 %v265, %v263
    %v444 = vpack.c.b16 %v268, %v266
    %v445 = vpack.c.b16 %v269, %v267
    %v446 = vpack.c.b16 %v272, %v270
    %v447 = vpack.c.b16 %v273, %v271
    %v448 = vpack.c.b16 %v276, %v274
    %v449 = vpack.c.b16 %v277, %v275
    %v450 = vpack.c.b16 %v280, %v278
    %v451 = vpack.c.b16 %v281, %v279
    %v452 = vpack.c.b16 %v284, %v282
    %v453 = vpack.c.b16 %v285, %v283
    %v454 = vpack.c.b16 %v288, %v286
    %v455 = vpack.c.b16 %v289, %v287
    %v456 = vpack.c.b16 %v292, %v290
    %v457 = vpack.c.b16 %v293, %v291
    %v458 = vpack.c.b16 %v296, %v294
    %v459 = vpack.c.b16 %v297, %v295
    %v460 = vpack.c.b16 %v300, %v298
    %v461 = vpack.c.b16 %v301, %v299
    %v462 = vpack.c.b16 %v304, %v302
    %v463 = vpack.c.b16 %v305, %v303
    %v464 = vpack.c.b16 %v308, %v306
    %v465 = vpack.c.b16 %v309, %v307
    %v466 = vpack.c.b16 %v312, %v310
    %v467 = vpack.c.b16 %v313, %v311
    %v468 = vpack.c.b16 %v316, %v314
    %v469 = vpack.c.b16 %v317, %v315
    %v470 = vpack.c.b16 %v320, %v318
    %v471 = vpack.c.b16 %v321, %v319
    %v472 = vpack.c.b16 %v324, %v322
    %v473 = vpack.c.b16 %v325, %v323
    %v474 = vpack.c.b16 %v328, %v326
    %v475 = vpack.c.b16 %v329, %v327
    %v476 = vpack.c.b16 %v332, %v330
    %v477 = vpack.c.b16 %v333, %v331
    %v478 = vpack.c.b16 %v336, %v334
    %v479 = vpack.c.b16 %v337, %v335
    %v480 = vpack.c.b16 %v340, %v338
    %v481 = vpack.c.b16 %v341, %v339
    %v482 = vpack.c.b16 %v344, %v342
    %v483 = vpack.c.b16 %v345, %v343
    %v484 = vpack.c.b16 %v348, %v346
    %v485 = vpack.c.b16 %v349, %v347
    %v486 = vpack.c.b16 %v352, %v350
    %v487 = vpack.c.b16 %v353, %v351
    %v488 = vpack.c.b16 %v356, %v354
    %v489 = vpack.c.b16 %v357, %v355
    %v490 = vpack.c.b16 %v360, %v358
    %v491 = vpack.c.b16 %v361, %v359
    %v492 = vpack.c.b16 %v364, %v362
    %v493 = vpack.c.b16 %v365, %v363
    %v494 = vpack.c.b16 %v368, %v366
    %v495 = vpack.c.b16 %v369, %v367
    %v496 = vpack.c.b16 %v372, %v370
    %v497 = vpack.c.b16 %v373, %v371
    %v498 = vpack.c.b16 %v376, %v374
    %v499 = vpack.c.b16 %v377, %v375
    %v500 = vpack.c.b16 %v380, %v378
    %v501 = vpack.c.b16 %v381, %v379
    %v502 = vpack.c.b16 %v384, %v382
    %v503 = vpack.c.b16 %v385, %v383
    %v504 = vpack.c.b16 %v388, %v386
    %v505 = vpack.c.b16 %v389, %v387
    %v506 = vpack.c.b16 %v392, %v390
    %v507 = vpack.c.b16 %v393, %v391
    %v508 = vpack.c.b16 %v396, %v394
    %v509 = vpack.c.b16 %v397, %v395
    %v510 = vpack.c.b16 %v400, %v398
    %v511 = vpack.c.b16 %v401, %v399
    %v512 = vpack.c.b16 %v404, %v402
    %v513 = vpack.c.b16 %v405, %v403
    %v514 = vpack.c.b16 %v408, %v406
    %v515 = vpack.c.b16 %v409, %v407
    %v516 = vpack.c.b16 %v412, %v410
    %v517 = vpack.c.b16 %v413, %v411
    %v518 = vpack.c.b16 %v416, %v414
    %v519 = vpack.c.b16 %v417, %v415
    %v520 = vpack.c.b16 %v420, %v418
    %v521 = vpack.c.b16 %v421, %v419
    %v522 = vpack.c.b16 %v424, %v422
    %v523 = vpack.c.b16 %v425, %v423
    %v524 = vpack.c.b16 %v428, %v426
    %v525 = vpack.c.b16 %v429, %v427
    %622 = vmatprep.subr.bf16.mxu0 %v431
    %623 = vmatpush1.bf16.msra.mxu0 %v430
    %624 = vmatprep.subr.bf16.mxu0 %v433
    %625 = vmatpush1.bf16.msra.mxu0 %v432
    %626 = vmatprep.subr.bf16.mxu0 %v435
    %627 = vmatpush1.bf16.msra.mxu0 %v434
    %628 = vmatprep.subr.bf16.mxu0 %v437
    %629 = vmatpush1.bf16.msra.mxu0 %v436
    %630 = vmatprep.subr.bf16.mxu0 %v439
    %631 = vmatpush1.bf16.msra.mxu0 %v438
    %632 = vmatprep.subr.bf16.mxu0 %v441
    %633 = vmatpush1.bf16.msra.mxu0 %v440
    %634 = vmatprep.subr.bf16.mxu0 %v443
    %635 = vmatpush1.bf16.msra.mxu0 %v442
    %636 = vmatprep.subr.bf16.mxu0 %v445
    %637 = vmatpush1.bf16.msra.mxu0 %v444
    %638 = vmatprep.subr.bf16.mxu0 %v447
    %639 = vmatpush1.bf16.msra.mxu0 %v446
    %640 = vmatprep.subr.bf16.mxu0 %v449
    %641 = vmatpush1.bf16.msra.mxu0 %v448
    %642 = vmatprep.subr.bf16.mxu0 %v451
    %643 = vmatpush1.bf16.msra.mxu0 %v450
    %644 = vmatprep.subr.bf16.mxu0 %v453
    %645 = vmatpush1.bf16.msra.mxu0 %v452
    %646 = vmatprep.subr.bf16.mxu0 %v455
    %647 = vmatpush1.bf16.msra.mxu0 %v454
    %648 = vmatprep.subr.bf16.mxu0 %v457
    %649 = vmatpush1.bf16.msra.mxu0 %v456
    %650 = vmatprep.subr.bf16.mxu0 %v459
    %651 = vmatpush1.bf16.msra.mxu0 %v458
    %652 = vmatprep.subr.bf16.mxu0 %v461
    %653 = vmatpush1.bf16.msra.mxu0 %v460
    %654 = vmatprep.mubr.bf16.mxu0 %v29
    %655 = vmatmul.mubr.bf16.gmra.mrb[0].mxu0 %v28
    %v656 = vpop.f32.mrb[0].mxu0
    %v657 = vadd.f32 %v135, %v656
    %v658 = vpop.f32.mrb[0].mxu0
    %v659 = vadd.f32 %v139, %v658
    %v660 = vpop.f32.mrb[0].mxu0
    %v661 = vpop.f32.mrb[0].mxu0
    %662 = vdwg.mxu0
    %663 = vmatprep.subr.bf16.mxu0 %v463
    %664 = vmatpush1.bf16.msra.mxu0 %v462
    %665 = vmatprep.subr.bf16.mxu0 %v465
    %666 = vmatpush1.bf16.msra.mxu0 %v464
    %667 = vmatprep.subr.bf16.mxu0 %v467
    %668 = vmatpush1.bf16.msra.mxu0 %v466
    %669 = vmatprep.subr.bf16.mxu0 %v469
    %670 = vmatpush1.bf16.msra.mxu0 %v468
    %671 = vmatprep.subr.bf16.mxu0 %v471
    %672 = vmatpush1.bf16.msra.mxu0 %v470
    %673 = vmatprep.subr.bf16.mxu0 %v473
    %674 = vmatpush1.bf16.msra.mxu0 %v472
    %675 = vmatprep.subr.bf16.mxu0 %v475
    %676 = vmatpush1.bf16.msra.mxu0 %v474
    %677 = vmatprep.subr.bf16.mxu0 %v477
    %678 = vmatpush1.bf16.msra.mxu0 %v476
    %679 = vmatprep.subr.bf16.mxu0 %v479
    %680 = vmatpush1.bf16.msra.mxu0 %v478
    %681 = vmatprep.subr.bf16.mxu0 %v481
    %682 = vmatpush1.bf16.msra.mxu0 %v480
    %683 = vmatprep.subr.bf16.mxu0 %v483
    %684 = vmatpush1.bf16.msra.mxu0 %v482
    %685 = vmatprep.subr.bf16.mxu0 %v485
    %686 = vmatpush1.bf16.msra.mxu0 %v484
    %687 = vmatprep.subr.bf16.mxu0 %v487
    %688 = vmatpush1.bf16.msra.mxu0 %v486
    %689 = vmatprep.subr.bf16.mxu0 %v489
    %690 = vmatpush1.bf16.msra.mxu0 %v488
    %691 = vmatprep.subr.bf16.mxu0 %v491
    %692 = vmatpush1.bf16.msra.mxu0 %v490
    %693 = vmatprep.subr.bf16.mxu0 %v493
    %694 = vmatpush1.bf16.msra.mxu0 %v492
    %695 = vmatprep.mubr.bf16.mxu0 %v31
    %696 = vmatmul.mubr.bf16.gmra.mrb[0].mxu0 %v30
    %v697 = vpop.f32.mrb[0].mxu0
    %v698 = vadd.f32 %v657, %v697
    %v699 = vpop.f32.mrb[0].mxu0
    %v700 = vadd.f32 %v659, %v699
    %v701 = vpop.f32.mrb[0].mxu0
    %v702 = vpop.f32.mrb[0].mxu0
    %703 = vdwg.mxu0
    %704 = vmatprep.subr.bf16.mxu0 %v495
    %705 = vmatpush1.bf16.msra.mxu0 %v494
    %706 = vmatprep.subr.bf16.mxu0 %v497
    %707 = vmatpush1.bf16.msra.mxu0 %v496
    %708 = vmatprep.subr.bf16.mxu0 %v499
    %709 = vmatpush1.bf16.msra.mxu0 %v498
    %710 = vmatprep.subr.bf16.mxu0 %v501
    %711 = vmatpush1.bf16.msra.mxu0 %v500
    %712 = vmatprep.subr.bf16.mxu0 %v503
    %713 = vmatpush1.bf16.msra.mxu0 %v502
    %714 = vmatprep.subr.bf16.mxu0 %v505
    %715 = vmatpush1.bf16.msra.mxu0 %v504
    %716 = vmatprep.subr.bf16.mxu0 %v507
    %717 = vmatpush1.bf16.msra.mxu0 %v506
    %718 = vmatprep.subr.bf16.mxu0 %v509
    %719 = vmatpush1.bf16.msra.mxu0 %v508
    %720 = vmatprep.subr.bf16.mxu0 %v511
    %721 = vmatpush1.bf16.msra.mxu0 %v510
    %722 = vmatprep.subr.bf16.mxu0 %v513
    %723 = vmatpush1.bf16.msra.mxu0 %v512
    %724 = vmatprep.subr.bf16.mxu0 %v515
    %725 = vmatpush1.bf16.msra.mxu0 %v514
    %726 = vmatprep.subr.bf16.mxu0 %v517
    %727 = vmatpush1.bf16.msra.mxu0 %v516
    %728 = vmatprep.subr.bf16.mxu0 %v519
    %729 = vmatpush1.bf16.msra.mxu0 %v518
    %730 = vmatprep.subr.bf16.mxu0 %v521
    %731 = vmatpush1.bf16.msra.mxu0 %v520
    %732 = vmatprep.subr.bf16.mxu0 %v523
    %733 = vmatpush1.bf16.msra.mxu0 %v522
    %734 = vmatprep.subr.bf16.mxu0 %v525
    %735 = vmatpush1.bf16.msra.mxu0 %v524
    %736 = vmatprep.mubr.bf16.mxu0 %v33
    %737 = vmatmul.mubr.bf16.gmra.mrb[0].mxu0 %v32
    %v738 = vpop.f32.mrb[0].mxu0
    %v739 = vadd.f32 %v698, %v738
    %v740 = vpop.f32.mrb[0].mxu0
    %v741 = vadd.f32 %v700, %v740
    %v742 = vpop.f32.mrb[0].mxu0
    %v743 = vpop.f32.mrb[0].mxu0
    %744 = vdwg.mxu0
    %v745 = vmax.f32 %v739, 0.0
    %v746 = vmax.f32 %v741, 0.0
    %v747 = vpack.c.bf16 %v745, %v745
    %v748 = vpack.c.bf16 %v746, %v746
    %v749 = vld [vmem:[%s3] sm:$0xf]
    %v750 = vld [vmem:[%s3 + $0x4] sm:$0xf]
    %v751 = vld [vmem:[%s3 + $0x8] sm:$0xf]
    %v752 = vld [vmem:[%s3 + $0xc] sm:$0xf]
    %v753 = vld [vmem:[%s3 + $0x10] sm:$0xf]
    %v754 = vld [vmem:[%s3 + $0x14] sm:$0xf]
    %v755 = vld [vmem:[%s3 + $0x18] sm:$0xf]
    %v756 = vld [vmem:[%s3 + $0x1c] sm:$0xf]
    %v757 = vld [vmem:[%s3 + $0x20] sm:$0xf]
    %v758 = vld [vmem:[%s3 + $0x24] sm:$0xf]
    %v759 = vld [vmem:[%s3 + $0x28] sm:$0xf]
    %v760 = vld [vmem:[%s3 + $0x2c] sm:$0xf]
    %v761 = vld [vmem:[%s3 + $0x30] sm:$0xf]
    %v762 = vld [vmem:[%s3 + $0x34] sm:$0xf]
    %v763 = vld [vmem:[%s3 + $0x38] sm:$0xf]
    %v764 = vld [vmem:[%s3 + $0x3c] sm:$0xf]
    %v765 = vld [vmem:[%s3 + $0x40] sm:$0xf]
    %v766 = vld [vmem:[%s3 + $0x44] sm:$0xf]
    %v767 = vld [vmem:[%s3 + $0x48] sm:$0xf]
    %v768 = vld [vmem:[%s3 + $0x4c] sm:$0xf]
    %v769 = vld [vmem:[%s3 + $0x50] sm:$0xf]
    %v770 = vld [vmem:[%s3 + $0x54] sm:$0xf]
    %v771 = vld [vmem:[%s3 + $0x58] sm:$0xf]
    %v772 = vld [vmem:[%s3 + $0x5c] sm:$0xf]
    %v773 = vld [vmem:[%s3 + $0x60] sm:$0xf]
    %v774 = vld [vmem:[%s3 + $0x64] sm:$0xf]
    %v775 = vld [vmem:[%s3 + $0x68] sm:$0xf]
    %v776 = vld [vmem:[%s3 + $0x6c] sm:$0xf]
    %v777 = vld [vmem:[%s3 + $0x70] sm:$0xf]
    %v778 = vld [vmem:[%s3 + $0x74] sm:$0xf]
    %v779 = vld [vmem:[%s3 + $0x78] sm:$0xf]
    %v780 = vld [vmem:[%s3 + $0x7c] sm:$0xf]
    %v781 = vld [vmem:[%s4] sm:$0x1]
    %v783 = vlaneseq
    %v784 = vshrl.u32 %v783, 7
    %v785 = vsub.s32 0, %v784
    %v786 = vrot.slane %v781, %v785
    %v820 = vunpack.c.l.b16 %v749
    %v821 = vunpack.c.l.b16 %v750
    %v822 = vunpack.c.l.b16 %v751
    %v823 = vunpack.c.l.b16 %v752
    %v824 = vunpack.c.l.b16 %v753
    %v825 = vunpack.c.l.b16 %v754
    %v826 = vunpack.c.l.b16 %v755
    %v827 = vunpack.c.l.b16 %v756
    %v828 = vunpack.c.l.b16 %v757
    %v829 = vunpack.c.l.b16 %v758
    %v830 = vunpack.c.l.b16 %v759
    %v831 = vunpack.c.l.b16 %v760
    %v832 = vunpack.c.l.b16 %v761
    %v833 = vunpack.c.l.b16 %v762
    %v834 = vunpack.c.l.b16 %v763
    %v835 = vunpack.c.l.b16 %v764
    %v836 = vunpack.c.l.b16 %v765
    %v837 = vunpack.c.l.b16 %v766
    %v838 = vunpack.c.l.b16 %v767
    %v839 = vunpack.c.l.b16 %v768
    %v840 = vunpack.c.l.b16 %v769
    %v841 = vunpack.c.l.b16 %v770
    %v842 = vunpack.c.l.b16 %v771
    %v843 = vunpack.c.l.b16 %v772
    %v844 = vunpack.c.l.b16 %v773
    %v845 = vunpack.c.l.b16 %v774
    %v846 = vunpack.c.l.b16 %v775
    %v847 = vunpack.c.l.b16 %v776
    %v848 = vunpack.c.l.b16 %v777
    %v849 = vunpack.c.l.b16 %v778
    %v850 = vunpack.c.l.b16 %v779
    %v851 = vunpack.c.l.b16 %v780
    %v852 = vpack.c.b16 %v821, %v820
    %v853 = vpack.c.b16 %v823, %v822
    %v854 = vpack.c.b16 %v825, %v824
    %v855 = vpack.c.b16 %v827, %v826
    %v856 = vpack.c.b16 %v829, %v828
    %v857 = vpack.c.b16 %v831, %v830
    %v858 = vpack.c.b16 %v833, %v832
    %v859 = vpack.c.b16 %v835, %v834
    %v860 = vpack.c.b16 %v837, %v836
    %v861 = vpack.c.b16 %v839, %v838
    %v862 = vpack.c.b16 %v841, %v840
    %v863 = vpack.c.b16 %v843, %v842
    %v864 = vpack.c.b16 %v845, %v844
    %v865 = vpack.c.b16 %v847, %v846
    %v866 = vpack.c.b16 %v849, %v848
    %v867 = vpack.c.b16 %v851, %v850
    %884 = vmatprep.subr.bf16.mxu0 0
    %885 = vmatpush1.bf16.msra.mxu0 %v852
    %886 = vmatprep.subr.bf16.mxu0 0
    %887 = vmatpush1.bf16.msra.mxu0 %v853
    %888 = vmatprep.subr.bf16.mxu0 0
    %889 = vmatpush1.bf16.msra.mxu0 %v854
    %890 = vmatprep.subr.bf16.mxu0 0
    %891 = vmatpush1.bf16.msra.mxu0 %v855
    %892 = vmatprep.subr.bf16.mxu0 0
    %893 = vmatpush1.bf16.msra.mxu0 %v856
    %894 = vmatprep.subr.bf16.mxu0 0
    %895 = vmatpush1.bf16.msra.mxu0 %v857
    %896 = vmatprep.subr.bf16.mxu0 0
    %897 = vmatpush1.bf16.msra.mxu0 %v858
    %898 = vmatprep.subr.bf16.mxu0 0
    %899 = vmatpush1.bf16.msra.mxu0 %v859
    %900 = vmatprep.subr.bf16.mxu0 0
    %901 = vmatpush1.bf16.msra.mxu0 %v860
    %902 = vmatprep.subr.bf16.mxu0 0
    %903 = vmatpush1.bf16.msra.mxu0 %v861
    %904 = vmatprep.subr.bf16.mxu0 0
    %905 = vmatpush1.bf16.msra.mxu0 %v862
    %906 = vmatprep.subr.bf16.mxu0 0
    %907 = vmatpush1.bf16.msra.mxu0 %v863
    %908 = vmatprep.subr.bf16.mxu0 0
    %909 = vmatpush1.bf16.msra.mxu0 %v864
    %910 = vmatprep.subr.bf16.mxu0 0
    %911 = vmatpush1.bf16.msra.mxu0 %v865
    %912 = vmatprep.subr.bf16.mxu0 0
    %913 = vmatpush1.bf16.msra.mxu0 %v866
    %914 = vmatprep.subr.bf16.mxu0 0
    %915 = vmatpush1.bf16.msra.mxu0 %v867
    %916 = vmatprep.mubr.bf16.mxu0 %v748
    %917 = vmatmul.mubr.bf16.gmra.mrb[0].mxu0 %v747
    %v918 = vpop.f32.mrb[0].mxu0
    %v919 = vadd.f32 %v786, %v918
    %v920 = vpop.f32.mrb[0].mxu0
    %v921 = vpop.f32.mrb[0].mxu0
    %v922 = vpop.f32.mrb[0].mxu0
    %923 = vdwg.mxu0
    %924 = vst [vmem:[#allocation2] sm:$0xff] %v919
    // Predicated region
    $region22: #{language_model_forward.1} parent=1 // pred_check
      _
    $region23: #{language_model_forward.1} parent=1 // pred_check_branch
      %926 = sbr.rel (0) target = $region25
    $region24: #{language_model_forward.1} parent=1 // pred_region
      %s928 = ssub.s32 128, 128
      %929 = vsyncadd [#allocation3], %s928
      %s931 = sshll.u32 [#allocation2], 4
      %s932 = int_to_ptr.vmem [resolvable:$true] %s931
      %934 = dma.vmem_to_hbm [thread:$0]  %s932, 128, %s5, [#allocation3]
    $region25: #{language_model_forward.1} parent=1 // pred_fallthru
      _
    // Predicated region
    $region26: #{language_model_forward.1} parent=1 // pred_check
      _
    $region27: #{language_model_forward.1} parent=1 // pred_check_branch
      %936 = sbr.rel (0) target = $region29
    $region28: #{language_model_forward.1} parent=1 // pred_region
      %937 = dma.done [#allocation3], 128
    $region29: #{language_model_forward.1} parent=1 // pred_fallthru
      _
    %938 = vsyncpa [#allocation3], 1

</llo_original>
